<compile_context>
chip_gen: v7x
topology: tpu7x:2x2x1
jax: 0.10.0
libtpu: 0.0.40
codegen_flags: <defaults>
</compile_context>

<pallas_src>
import functools

import jax
import jax.numpy as jnp
from jax.experimental import pallas as pl
from jax.experimental.pallas import tpu as pltpu


def _nce_tile_kernel(pred_ref, labels_ref, out_ref, *, n_total, tile_rows,
                     num_classes):
    # pred_ref: (TN, C) logits block in its HBM dtype; labels_ref: (TN, 1) int32.
    pred = pred_ref[...]                                   # (TN, C) raw dtype
    labels = labels_ref[...]                               # (TN, 1) int32

    # Pass 1: row max in the input dtype (exact for max; bf16 stays packed).
    m = jnp.max(pred, axis=1, keepdims=True).astype(jnp.float32)        # (TN,1)

    # Pass 2: raw-pred row sum, f32 accumulation (cast has a single consumer,
    # fuses per-vreg -> no f32 tile copy).
    sum_pred = jnp.sum(pred.astype(jnp.float32), axis=1, keepdims=True)  # (TN,1)

    # Pass 3: pred[label] via iota-compare masked row sum on the raw logits.
    class_ids = jax.lax.broadcasted_iota(
        jnp.int32, (tile_rows, num_classes), 1)                          # (TN,C)
    pred_at_label = jnp.sum(
        jnp.where(class_ids == labels, pred.astype(jnp.float32), 0.0),
        axis=1, keepdims=True)                                           # (TN,1)

    # Pass 4: exp/LSE. `pred - m` feeds only exp -> fuses, never materialized.
    sumexp = jnp.sum(jnp.exp(pred.astype(jnp.float32) - m),
                     axis=1, keepdims=True)                              # (TN,1)
    logz = m + jnp.log(sumexp)                                           # (TN,1)

    # Mask rows past the true batch size (partial last tile).  Guard num/den so
    # padded garbage never produces inf/NaN before the final select.
    row = pl.program_id(0) * tile_rows + jax.lax.broadcasted_iota(
        jnp.int32, (tile_rows, 1), 0)
    valid = row < n_total
    num = jnp.where(valid, logz - pred_at_label, 0.0)          # -logp[label]
    den = jnp.where(valid, jnp.float32(num_classes) * logz - sum_pred, 1.0)

    nce = jnp.float32(1e-4) + jnp.float32(1.0 - 1e-4) * (num / den)
    nce = jnp.where(valid, nce, 0.0)

    # Partial sum of NCE for this tile; mean + scale are applied outside.
    out_ref[0, 0] = jnp.sum(nce)


def _pick_tile_rows(n_rows, n_classes, itemsize, sublane,
                    budget_bytes=6 * 1024 * 1024):
    """Rows per block, budgeting the real per-tile VMEM footprint.

    Per row:
      pred block   : C * itemsize, double buffered           -> 2*C*itemsize
      labels block : (TN,1) int32 lane-pads to 128 lanes     -> 2*128*4 = 1024 B
      f32 temps    : fused in-kernel intermediates, headroom -> 2*C*4
    """
    bytes_per_row = 2 * n_classes * itemsize + 1024 + 2 * n_classes * 4
    max_rows = max(sublane, budget_bytes // bytes_per_row)
    tn = min(n_rows, max_rows)
    # Keep >= 2 tiles when possible so the "parallel" grid axis can feed both
    # v7x TensorCores (harmless single extra grid step on v5e/v6e).
    tn = min(tn, max(sublane, -(-n_rows // 2)))
    if tn < n_rows:
        tn = max(sublane, (tn // sublane) * sublane)   # sublane alignment
    return tn


def normalized_cross_entropy(pred, labels, num_classes, scale=1.0, gamma=1.0,
                             tile_rows=None):
    """Pallas implementation of NormalizedCrossEntropy.forward.

    pred:   (N, num_classes) float array (f32 or bf16; promoted in-kernel)
    labels: (N,) int array with values in [0, num_classes)
    Returns a scalar float32.
    """
    # gamma is stored by the PyTorch module but unused in forward.
    del gamma
    N, C = pred.shape
    assert C == num_classes
    labels_2d = labels.astype(jnp.int32).reshape(N, 1)

    itemsize = jnp.dtype(pred.dtype).itemsize
    sublane = max(8, 32 // max(1, itemsize))   # 8 f32, 16 bf16, 32 int8
    TN = tile_rows if tile_rows is not None else _pick_tile_rows(
        N, C, itemsize, sublane)
    num_tiles = pl.cdiv(N, TN)

    # Explicit scoped-VMEM limit from the real footprint (double-buffered
    # inputs + lane-padded labels + f32 temps), clamped to [32 MiB, 64 MiB].
    pred_block_bytes = TN * C * itemsize
    labels_block_bytes = TN * 128 * 4
    est = 2 * pred_block_bytes + 2 * labels_block_bytes + 2 * TN * C * 4 \
        + (4 << 20)
    vmem_limit = int(min(64 << 20, max(32 << 20, est)))

    kernel = functools.partial(
        _nce_tile_kernel, n_total=N, tile_rows=TN, num_classes=C)

    partials = pl.pallas_call(
        kernel,
        out_shape=jax.ShapeDtypeStruct((num_tiles, 1), jnp.float32),
        grid=(num_tiles,),
        in_specs=[
            pl.BlockSpec((TN, C), lambda i: (i, 0)),   # pred tile   (VMEM)
            pl.BlockSpec((TN, 1), lambda i: (i, 0)),   # labels tile (VMEM)
        ],
        out_specs=pl.BlockSpec(
            (1, 1), lambda i: (i, 0), memory_space=pltpu.SMEM),
        compiler_params=pltpu.CompilerParams(
            dimension_semantics=("parallel",),
            vmem_limit_bytes=vmem_limit),
    )(pred, labels_2d)

    # Tiny epilogue in JAX: mean over N and scale.
    return (jnp.float32(scale) / jnp.float32(N)) * jnp.sum(partials)


def _reference(pred, labels, num_classes, scale=1.0):
    logp = jax.nn.log_softmax(pred.astype(jnp.float32), axis=1)
    oh = jax.nn.one_hot(labels, num_classes, dtype=jnp.float32)
    oh = jnp.clip(oh, 0.0001, 1.0)
    nce = -jnp.sum(oh * logp, axis=1) / -jnp.sum(logp, axis=1)
    return scale * jnp.mean(nce)


if __name__ == "__main__":
    key = jax.random.PRNGKey(0)
    k1, k2, k3, k4 = jax.random.split(key, 4)

    # Test 1: small single-tile case (batch=8, num_classes=32), f32.
    N, C = 8, 32
    pred = jax.random.normal(k1, (N, C), dtype=jnp.float32)
    labels = jax.random.randint(k2, (N,), 0, C, dtype=jnp.int32)
    out = normalized_cross_entropy(pred, labels, C, scale=1.0, gamma=1.0)
    out = jax.block_until_ready(out)
    ref = _reference(pred, labels, C, scale=1.0)
    assert jnp.allclose(out, ref, rtol=1e-5, atol=1e-5), (out, ref)

    # Test 2: multi-tile with a partial (masked) last tile, f32, explicit TN.
    N2, C2 = 20, 32
    pred2 = jax.random.normal(k3, (N2, C2), dtype=jnp.float32)
    labels2 = jax.random.randint(k4, (N2,), 0, C2, dtype=jnp.int32)
    out2 = normalized_cross_entropy(pred2, labels2, C2, scale=2.0, gamma=1.0,
                                    tile_rows=8)
    out2 = jax.block_until_ready(out2)
    ref2 = _reference(pred2, labels2, C2, scale=2.0)
    assert jnp.allclose(out2, ref2, rtol=1e-5, atol=1e-5), (out2, ref2)

    # Test 3: bf16 logits in HBM (promoted inside the kernel).
    N3, C3 = 16, 32
    pred3 = jax.random.normal(k1, (N3, C3), dtype=jnp.float32).astype(jnp.bfloat16)
    labels3 = jax.random.randint(k2, (N3,), 0, C3, dtype=jnp.int32)
    out3 = normalized_cross_entropy(pred3, labels3, C3, scale=1.0, gamma=1.0)
    out3 = jax.block_until_ready(out3)
    ref3 = _reference(pred3, labels3, C3, scale=1.0)
    assert jnp.allclose(out3, ref3, rtol=1e-4, atol=1e-4), (out3, ref3)

    # Test 4: bf16, auto tile selection -> multiple tiles (>=2 for v7x) plus a
    # masked partial last tile (40 rows -> 16 + 16 + 8).
    N4, C4 = 40, 32
    pred4 = jax.random.normal(k3, (N4, C4), dtype=jnp.float32).astype(jnp.bfloat16)
    labels4 = jax.random.randint(k4, (N4,), 0, C4, dtype=jnp.int32)
    out4 = normalized_cross_entropy(pred4, labels4, C4, scale=0.5, gamma=1.0)
    out4 = jax.block_until_ready(out4)
    ref4 = _reference(pred4, labels4, C4, scale=0.5)
    assert jnp.allclose(out4, ref4, rtol=1e-4, atol=1e-4), (out4, ref4)

    print("KERNEL_OK")
</pallas_src>

<mosaic_0001>
module attributes {stable_mosaic.version = 11 : i64} {
  func.func @_nce_tile_kernel(%arg0: i32, %arg1: memref<8x32xf32, #tpu.memory_space<vmem>>, %arg2: memref<8x1xi32, #tpu.memory_space<vmem>>, %arg3: memref<1x1xf32, #tpu.memory_space<smem>>) attributes {dimension_semantics = [#tpu.dimension_semantics<parallel>], iteration_bounds = array<i64: 1>, scalar_prefetch = 0 : i64, scratch_operands = 0 : i64, tpu.core_type = #tpu.core_type<tc>, window_params = [{transform_indices = @transform_0, window_bounds = array<i64: 8, 32>}, {transform_indices = @transform_1, window_bounds = array<i64: 8, 1>}, {transform_indices = @transform_2, window_bounds = array<i64: 1, 1>}]} {
    %c0 = arith.constant 0 : index
    %c0_0 = arith.constant 0 : index
    %0 = vector.load %arg1[%c0, %c0_0] : memref<8x32xf32, #tpu.memory_space<vmem>>, vector<8x32xf32>
    %c0_1 = arith.constant 0 : index
    %c0_2 = arith.constant 0 : index
    %1 = vector.load %arg2[%c0_1, %c0_2] : memref<8x1xi32, #tpu.memory_space<vmem>>, vector<8x1xi32>
    %cst = arith.constant dense<0xFF800000> : vector<8xf32>
    %2 = vector.multi_reduction <maximumf>, %0, %cst [1] : vector<8x32xf32> to vector<8xf32>
    %3 = vector.shape_cast %2 : vector<8xf32> to vector<8x1xf32>
    %cst_3 = arith.constant dense<0.000000e+00> : vector<8xf32>
    %4 = vector.multi_reduction <add>, %0, %cst_3 [1] : vector<8x32xf32> to vector<8xf32>
    %5 = vector.shape_cast %4 : vector<8xf32> to vector<8x1xf32>
    %6 = tpu.iota {dimensions = array<i32: 1>} : vector<8x32xi32>
    %7 = vector.broadcast %1 : vector<8x1xi32> to vector<8x32xi32>
    %8 = arith.cmpi eq, %6, %7 : vector<8x32xi32>
    %cst_4 = arith.constant 0.000000e+00 : f32
    %9 = vector.broadcast %cst_4 : f32 to vector<8x32xf32>
    %10 = arith.select %8, %0, %9 : vector<8x32xi1>, vector<8x32xf32>
    %cst_5 = arith.constant dense<0.000000e+00> : vector<8xf32>
    %11 = vector.multi_reduction <add>, %10, %cst_5 [1] : vector<8x32xf32> to vector<8xf32>
    %12 = vector.shape_cast %11 : vector<8xf32> to vector<8x1xf32>
    %13 = vector.broadcast %3 : vector<8x1xf32> to vector<8x32xf32>
    %14 = arith.subf %0, %13 : vector<8x32xf32>
    %15 = math.exp %14 : vector<8x32xf32>
    %cst_6 = arith.constant dense<0.000000e+00> : vector<8xf32>
    %16 = vector.multi_reduction <add>, %15, %cst_6 [1] : vector<8x32xf32> to vector<8xf32>
    %17 = vector.shape_cast %16 : vector<8xf32> to vector<8x1xf32>
    %18 = math.log %17 : vector<8x1xf32>
    %19 = arith.addf %3, %18 : vector<8x1xf32>
    %c8_i32 = arith.constant 8 : i32
    %20 = arith.muli %arg0, %c8_i32 : i32
    %21 = tpu.iota {dimensions = array<i32: 0>} : vector<8x1xi32>
    %22 = vector.broadcast %20 : i32 to vector<8x1xi32>
    %23 = arith.addi %22, %21 : vector<8x1xi32>
    %c8_i32_7 = arith.constant 8 : i32
    %24 = vector.broadcast %c8_i32_7 : i32 to vector<8x1xi32>
    %25 = arith.cmpi slt, %23, %24 : vector<8x1xi32>
    %26 = arith.subf %19, %12 : vector<8x1xf32>
    %cst_8 = arith.constant 0.000000e+00 : f32
    %27 = vector.broadcast %cst_8 : f32 to vector<8x1xf32>
    %28 = arith.select %25, %26, %27 : vector<8x1xi1>, vector<8x1xf32>
    %cst_9 = arith.constant 3.200000e+01 : f32
    %29 = vector.broadcast %cst_9 : f32 to vector<8x1xf32>
    %30 = arith.mulf %29, %19 : vector<8x1xf32>
    %31 = arith.subf %30, %5 : vector<8x1xf32>
    %cst_10 = arith.constant 1.000000e+00 : f32
    %32 = vector.broadcast %cst_10 : f32 to vector<8x1xf32>
    %33 = arith.select %25, %31, %32 : vector<8x1xi1>, vector<8x1xf32>
    %34 = arith.divf %28, %33 : vector<8x1xf32>
    %cst_11 = arith.constant 0.999899983 : f32
    %35 = vector.broadcast %cst_11 : f32 to vector<8x1xf32>
    %36 = arith.mulf %35, %34 : vector<8x1xf32>
    %cst_12 = arith.constant 9.99999974E-5 : f32
    %37 = vector.broadcast %cst_12 : f32 to vector<8x1xf32>
    %38 = arith.addf %37, %36 : vector<8x1xf32>
    %cst_13 = arith.constant 0.000000e+00 : f32
    %39 = vector.broadcast %cst_13 : f32 to vector<8x1xf32>
    %40 = arith.select %25, %38, %39 : vector<8x1xi1>, vector<8x1xf32>
    %41 = vector.shape_cast %40 : vector<8x1xf32> to vector<1x8x1xf32>
    %cst_14 = arith.constant dense<0.000000e+00> : vector<1xf32>
    %42 = vector.multi_reduction <add>, %41, %cst_14 [1, 2] : vector<1x8x1xf32> to vector<1xf32>
    %43 = vector.shape_cast %42 : vector<1xf32> to vector<1x1x1xf32>
    %44 = vector.extract %43[0, 0, 0] : f32 from vector<1x1x1xf32>
    %c0_15 = arith.constant 0 : index
    %c0_16 = arith.constant 0 : index
    %45 = memref.load %arg3[%c0_15, %c0_16] : memref<1x1xf32, #tpu.memory_space<smem>>
    memref.store %44, %arg3[%c0_15, %c0_16] : memref<1x1xf32, #tpu.memory_space<smem>>
    return
  }
  func.func @transform_0(%arg0: i32) -> (i32, i32) {
    %c0_i32 = arith.constant 0 : i32
    %c0_i32_0 = arith.constant 0 : i32
    return %arg0, %c0_i32 : i32, i32
  }
  func.func @transform_1(%arg0: i32) -> (i32, i32) {
    %c0_i32 = arith.constant 0 : i32
    %c0_i32_0 = arith.constant 0 : i32
    return %arg0, %c0_i32 : i32, i32
  }
  func.func @transform_2(%arg0: i32) -> (i32, i32) {
    %c0_i32 = arith.constant 0 : i32
    %c0_i32_0 = arith.constant 0 : i32
    return %arg0, %c0_i32 : i32, i32
  }
}

</mosaic_0001>

<llo_original>
// kernel: tpu_custom_call.1
$region0: #{tpu_custom_call.1}
  #allocation0 [shape = 'u32[]', space=smem, size = 0x4, offset = 0x4, fixed_abs, tag = 'smem constant byte address 0x4 - core index']
  #allocation1 [shape = 'u32[144,128]{1,0:T(1,128)}', space=vmem, size = 0x12000, scoped, tag = 'internal scratch']
  %s0 = inlined_call_operand.vmem [shape: f32[8,32], index: 0, kind: input, shape index: {}]
  %s1 = inlined_call_operand.vmem [shape: s32[8,1], index: 1, kind: input, shape index: {}]
  %s2 = inlined_call_operand.hbm [shape: f32[1,1], index: 2, kind: output, shape index: {}]
  %s3 = sld [smem:[#allocation0]]
  $region18: #{tpu_custom_call.1} parent=0
    _
  %s5 = ssub.s32 1, %s3
  %s6 = scalar_select 0, %s5, %s3
  $region1: #{tpu_custom_call.1} parent=0
    #allocation2 [shape = 'u8[512]{0}', space=smem, size = 0x200, scoped, tag = 'output window, operand 0, single buffered']
    #allocation3 [shape = 's32[1]{0}', space=sflag, size = 0x4, scoped, tag = 'scoped memory for tpu_custom_call.1']
    %7 = vsyncpa [#allocation3], 0
    // Predicated region
    $region2: #{tpu_custom_call.1} parent=1 // pred_check
      _
    $region3: #{tpu_custom_call.1} parent=1 // pred_check_branch
      %9 = sbr.rel (0) target = $region5
    $region4: #{tpu_custom_call.1} parent=1 // pred_region
      _
    $region5: #{tpu_custom_call.1} parent=1 // pred_fallthru
      _
    // Predicated region
    $region6: #{tpu_custom_call.1} parent=1 // pred_check
      _
    $region7: #{tpu_custom_call.1} parent=1 // pred_check_branch
      %11 = sbr.rel (0) target = $region9
    $region8: #{tpu_custom_call.1} parent=1 // pred_region
      _
    $region9: #{tpu_custom_call.1} parent=1 // pred_fallthru
      _
    %v12 = vld [vmem:[%s0] sm:$0xff]
    %v13 = vld [vmem:[%s1] sm:$0xff]
    %vm14 = vcmask 261120
    %v15 = vsel %vm14, %v12, -inf
    %16 = vmax.xlane.f32.xlu0 %v15
    %v17 = vpop.xlane.xlu0 %16
    %v18 = vsel %vm14, %v12, 0.0
    %19 = vadd.xlane.f32.xlu0 %v18
    %v20 = vpop.xlane.xlu0 %19
    %v21 = vlaneseq
    %v22 = vand.u32 %v21, 127
    %23 = vset.pattern.permute.xlu0 0
    %24 = vperm.xlu0 %23, %v13
    %v25 = vpop.permute.xlu0 %24
    %vm26 = vcmp.eq.s32.totalorder %v22, %v25
    %v27 = vsel %vm26, %v12, 0.0
    %v28 = vsel %vm14, %v27, 0.0
    %29 = vadd.xlane.f32.xlu0 %v28
    %v30 = vpop.xlane.xlu0 %29
    %v31 = vsub.f32 %v12, %v17
    %v32 = vmul.f32 %v31, 1.442695
    %v33 = vpow.pop %v32
    %v34 = vsel %vm14, %v33, 0.0
    %35 = vadd.xlane.f32.xlu0 %v34
    %v36 = vpop.xlane.xlu0 %35
    %v37 = vlog2.pop %v36
    %v38 = vmul.f32 %v37, 0.6931472
    %v39 = vadd.f32 %v17, %v38
    %s40 = smul.u32 0, 8
    %v41 = vlaneseq
    %v42 = vshrl.u32 %v41, 7
    %v43 = vstv %s40
    %v44 = vadd.s32 %v43, %v42
    %vm45 = vcmp.lt.s32.totalorder %v44, 8
    %v46 = vsub.f32 %v39, %v30
    %v47 = vsel %vm45, %v46, 0.0
    %v48 = vmul.f32 %v39, 32.0
    %v49 = vsub.f32 %v48, %v20
    %v50 = vsel %vm45, %v49, 1.0
    %v51 = vrcp.pop %v50
    %v52 = vmul.f32 %v47, %v51
    %v53 = vmul.f32 %v52, 0.9999
    %v54 = vadd.f32 %v53, 0.0001
    %v55 = vsel %vm45, %v54, 0.0
    %vm56 = vcmask 7168
    %v57 = vsel %vm56, %v55, 0.0
    %58 = vadd.xlane.f32.xlu0 %v57
    %v59 = vpop.xlane.xlu0 %58
    %v60 = vrot.slane %v59, 4
    %v61 = vadd.f32 %v59, %v60
    %v62 = vrot.slane %v61, 2
    %v63 = vadd.f32 %v61, %v62
    %v64 = vrot.slane %v63, 1
    %v65 = vadd.f32 %v63, %v64
    %s66 = vtos %v65
    %s67 = scalar_lea.smem [#allocation2], 0
    %68 = sst [smem:[%s67]] %s66
    // Predicated region
    $region10: #{tpu_custom_call.1} parent=1 // pred_check
      _
    $region11: #{tpu_custom_call.1} parent=1 // pred_check_branch
      %70 = sbr.rel (0) target = $region13
    $region12: #{tpu_custom_call.1} parent=1 // pred_region
      %s72 = ssub.s32 16, 16
      %73 = vsyncadd [#allocation3], %s72
      %76 = dma.smem_to_hbm [#allocation2], 16, %s2, [#allocation3]
    $region13: #{tpu_custom_call.1} parent=1 // pred_fallthru
      _
    // Predicated region
    $region14: #{tpu_custom_call.1} parent=1 // pred_check
      _
    $region15: #{tpu_custom_call.1} parent=1 // pred_check_branch
      %78 = sbr.rel (0) target = $region17
    $region16: #{tpu_custom_call.1} parent=1 // pred_region
      %79 = dma.done [#allocation3], 16
    $region17: #{tpu_custom_call.1} parent=1 // pred_fallthru
      _
    %80 = sfence
    %81 = vsyncpa [#allocation3], 1

</llo_original>
